<compile_context>
chip_gen: v7x
topology: tpu7x:2x2x1
jax: 0.10.0
libtpu: 0.0.40
codegen_flags: <defaults>
</compile_context>

<pallas_src>
import math

import jax
import jax.numpy as jnp
from jax.experimental import pallas as pl
from jax.experimental.pallas import tpu as pltpu


def _round_up(v, m):
    return (v + m - 1) // m * m


def _encoder_kernel(x_ref,
                    w1_ref, b1_ref,
                    w2_ref, b2_ref,
                    w3_ref, b3_ref,
                    w4_ref, b4_ref,
                    o_ref):
    # One batch tile; four layers fused, all intermediates stay in VMEM.
    # Matmul operands in the weights' dtype (bf16) with f32 MXU accumulation;
    # bias/ReLU math stays f32 (VPU).
    cdt = w1_ref.dtype

    h = jnp.dot(x_ref[...].astype(cdt), w1_ref[...],
                preferred_element_type=jnp.float32) + b1_ref[...]
    h = jnp.maximum(h, 0.0)

    h = jnp.dot(h.astype(cdt), w2_ref[...],
                preferred_element_type=jnp.float32) + b2_ref[...]
    h = jnp.maximum(h, 0.0)

    h = jnp.dot(h.astype(cdt), w3_ref[...],
                preferred_element_type=jnp.float32) + b3_ref[...]
    h = jnp.maximum(h, 0.0)

    out = jnp.dot(h.astype(cdt), w4_ref[...],
                  preferred_element_type=jnp.float32) + b4_ref[...]
    o_ref[...] = out.astype(o_ref.dtype)


def prepare_encoder_params(weights, biases, *, compute_dtype=jnp.bfloat16):
    """One-time weight prep (hoisted out of the per-call path).

    Pads the narrow output edge (Z) to 128 lanes so the kernel's output store
    is lane-dense, and casts weights to the MXU compute dtype (bf16). Biases
    stay f32 for the VPU add. Padded w4/b4 columns are zero, so the discarded
    output lanes are exactly zero.
    """
    # TODO(synk): on v7x, fp8(e4m3) weights + per-channel scales would halve
    # the weight DMA that dominates small-batch latency; keep bf16 for v5e/v6e.
    w1, w2, w3, w4 = weights
    b1, b2, b3, b4 = biases
    z_size = w4.shape[1]
    z_pad = _round_up(z_size, 128)
    if z_pad != z_size:
        w4 = jnp.zeros((w4.shape[0], z_pad), w4.dtype).at[:, :z_size].set(w4)
        b4 = jnp.zeros((1, z_pad), b4.dtype).at[:, :z_size].set(b4)
    ws = tuple(w.astype(compute_dtype) for w in (w1, w2, w3, w4))
    bs = tuple(b.astype(jnp.float32) for b in (b1, b2, b3, b4))
    return {"weights": ws, "biases": bs, "z_size": z_size}


def _pick_batch_tile(batch, batch_tile):
    """Large tiles to amortize per-step overhead; >=2 steps for v7x megacore."""
    b8 = _round_up(batch, 8)
    if b8 < 512:
        # Small batch: a single grid step (splitting only adds overhead).
        return b8
    n_steps = max(2, pl.cdiv(b8, batch_tile))   # keep both v7x TCs busy
    bt = _round_up(pl.cdiv(b8, n_steps), 8)
    return min(bt, batch_tile)


def encoder_forward(x, prepared, *, batch_tile=1024, out_dtype=jnp.bfloat16):
    """x: [B, params_size] f32. `prepared` from prepare_encoder_params."""
    ws = prepared["weights"]
    bs = prepared["biases"]
    z_size = prepared["z_size"]

    B, P = x.shape
    assert ws[0].shape[0] == P, "params_size mismatch with prepared weights"
    z_pad = ws[3].shape[1]

    bt = _pick_batch_tile(B, batch_tile)
    Bpad = _round_up(B, bt)

    # Only pad the batch dim, and only when needed; last dim stays at P
    # (block == full array dim, so no 128-lane HBM padding of x).
    xp = x if Bpad == B else jnp.zeros((Bpad, P), x.dtype).at[:B, :].set(x)

    grid = (Bpad // bt,)

    in_specs = [pl.BlockSpec((bt, P), lambda i: (i, 0))]
    for w, b in zip(ws, bs):
        # Grid-invariant blocks (constant index_map) stay resident across steps.
        # TODO(synk): pipeline_mode=pl.Buffered(1) would drop their (tiny)
        # double buffers if VMEM headroom is ever needed for huge batch tiles.
        in_specs.append(pl.BlockSpec(w.shape, lambda i: (0, 0)))
        in_specs.append(pl.BlockSpec(b.shape, lambda i: (0, 0)))
    out_spec = pl.BlockSpec((bt, z_pad), lambda i: (i, 0))

    out_itemsize = jnp.dtype(out_dtype).itemsize
    flops = 2 * Bpad * (P * 512 + 512 * 256 + 256 * 128 + 128 * z_pad)
    bytes_accessed = (xp.size * xp.dtype.itemsize
                      + sum(a.size * a.dtype.itemsize for a in ws + bs)
                      + Bpad * z_pad * out_itemsize)

    flat_args = [xp]
    for w, b in zip(ws, bs):
        flat_args.append(w)
        flat_args.append(b)

    out = pl.pallas_call(
        _encoder_kernel,
        out_shape=jax.ShapeDtypeStruct((Bpad, z_pad), out_dtype),
        grid=grid,
        in_specs=in_specs,
        out_specs=out_spec,
        compiler_params=pltpu.CompilerParams(
            dimension_semantics=("parallel",)),
        cost_estimate=pl.CostEstimate(
            flops=flops, transcendentals=0, bytes_accessed=bytes_accessed),
    )(*flat_args)

    return out[:B, :z_size].astype(x.dtype)


def init_encoder_params(key, params_size, z_size):
    """PyTorch nn.Linear default init: U[-1/sqrt(fan_in), 1/sqrt(fan_in)]."""
    dims = [params_size, 512, 256, 128, z_size]
    weights, biases = [], []
    for i in range(4):
        fan_in, fan_out = dims[i], dims[i + 1]
        key, kw, kb = jax.random.split(key, 3)
        bound = 1.0 / math.sqrt(fan_in)
        # stored as [in, out] so the kernel does x @ W (== torch x @ W^T)
        w = jax.random.uniform(kw, (fan_in, fan_out), jnp.float32, -bound, bound)
        b = jax.random.uniform(kb, (1, fan_out), jnp.float32, -bound, bound)
        weights.append(w)
        biases.append(b)
    return weights, biases


def encoder_reference(x, weights, biases, *, compute_dtype=jnp.bfloat16):
    """Pure-JAX reference mirroring the kernel's bf16-operand / f32-accum math."""
    h = x.astype(jnp.float32)
    for i in range(4):
        y = jnp.dot(h.astype(compute_dtype), weights[i].astype(compute_dtype),
                    preferred_element_type=jnp.float32) + biases[i]
        h = jnp.maximum(y, 0.0) if i < 3 else y
    return h.astype(x.dtype)


if __name__ == "__main__":
    key = jax.random.PRNGKey(0)

    params_size = 32
    z_size = 16

    key, kx = jax.random.split(key)
    weights, biases = init_encoder_params(key, params_size, z_size)

    # One-time weight prep (padding + bf16 cast) hoisted out of the call path.
    prepared = prepare_encoder_params(weights, biases)
    prepared = jax.tree_util.tree_map(jax.block_until_ready, prepared)

    # Tolerance accounts for bf16 matmul operands and the bf16 output store.
    atol = rtol = 2e-2

    # Small batch: single grid step, whole batch in one tile.
    x_small = jax.random.normal(kx, (8, params_size), jnp.float32)
    out_small = jax.block_until_ready(encoder_forward(x_small, prepared))
    ref_small = encoder_reference(x_small, weights, biases)
    assert out_small.shape == (8, z_size)
    assert jnp.allclose(out_small, ref_small, atol=atol, rtol=rtol), \
        "small-batch mismatch vs reference"

    # Larger batch: exercises the tiled path with >= 2 parallel grid steps
    # (so both TensorCores are used on v7x): B=512 -> bt=256, grid=(2,).
    key, kx2 = jax.random.split(key)
    x_big = jax.random.normal(kx2, (512, params_size), jnp.float32)
    out_big = jax.block_until_ready(encoder_forward(x_big, prepared))
    ref_big = encoder_reference(x_big, weights, biases)
    assert out_big.shape == (512, z_size)
    assert jnp.allclose(out_big, ref_big, atol=atol, rtol=rtol), \
        "large-batch mismatch vs reference"

    print("KERNEL_OK")
</pallas_src>

<mosaic_0001>
module attributes {stable_mosaic.version = 11 : i64} {
  func.func @_encoder_kernel(%arg0: i32, %arg1: memref<8x32xf32, #tpu.memory_space<vmem>>, %arg2: memref<32x512xbf16, #tpu.memory_space<vmem>>, %arg3: memref<1x512xf32, #tpu.memory_space<vmem>>, %arg4: memref<512x256xbf16, #tpu.memory_space<vmem>>, %arg5: memref<1x256xf32, #tpu.memory_space<vmem>>, %arg6: memref<256x128xbf16, #tpu.memory_space<vmem>>, %arg7: memref<1x128xf32, #tpu.memory_space<vmem>>, %arg8: memref<128x128xbf16, #tpu.memory_space<vmem>>, %arg9: memref<1x128xf32, #tpu.memory_space<vmem>>, %arg10: memref<8x128xbf16, #tpu.memory_space<vmem>>) attributes {dimension_semantics = [#tpu.dimension_semantics<parallel>], iteration_bounds = array<i64: 1>, scalar_prefetch = 0 : i64, scratch_operands = 0 : i64, tpu.core_type = #tpu.core_type<tc>, window_params = [{transform_indices = @transform_0, window_bounds = array<i64: 8, 32>}, {pipeline_mode = #tpu.pipeline_mode<synchronous>, transform_indices = @transform_1, window_bounds = array<i64: 32, 512>}, {pipeline_mode = #tpu.pipeline_mode<synchronous>, transform_indices = @transform_2, window_bounds = array<i64: 1, 512>}, {pipeline_mode = #tpu.pipeline_mode<synchronous>, transform_indices = @transform_3, window_bounds = array<i64: 512, 256>}, {pipeline_mode = #tpu.pipeline_mode<synchronous>, transform_indices = @transform_4, window_bounds = array<i64: 1, 256>}, {pipeline_mode = #tpu.pipeline_mode<synchronous>, transform_indices = @transform_5, window_bounds = array<i64: 256, 128>}, {pipeline_mode = #tpu.pipeline_mode<synchronous>, transform_indices = @transform_6, window_bounds = array<i64: 1, 128>}, {pipeline_mode = #tpu.pipeline_mode<synchronous>, transform_indices = @transform_7, window_bounds = array<i64: 128, 128>}, {pipeline_mode = #tpu.pipeline_mode<synchronous>, transform_indices = @transform_8, window_bounds = array<i64: 1, 128>}, {transform_indices = @transform_9, window_bounds = array<i64: 8, 128>}]} {
    %c0 = arith.constant 0 : index
    %c0_0 = arith.constant 0 : index
    %0 = vector.load %arg1[%c0, %c0_0] : memref<8x32xf32, #tpu.memory_space<vmem>>, vector<8x32xf32>
    %1 = arith.truncf %0 : vector<8x32xf32> to vector<8x32xbf16>
    %c0_1 = arith.constant 0 : index
    %c0_2 = arith.constant 0 : index
    %2 = vector.load %arg2[%c0_1, %c0_2] : memref<32x512xbf16, #tpu.memory_space<vmem>>, vector<32x512xbf16>
    %cst = arith.constant dense<0.000000e+00> : vector<8x512xf32>
    %3 = tpu.matmul %1, %2, %cst {dimension_numbers = #tpu.dot_dimension_numbers<[1], [0], [0], [1], [0, 0, 1, 1], [], []>} : vector<8x32xbf16>, vector<32x512xbf16>, vector<8x512xf32> -> vector<8x512xf32>
    %c0_3 = arith.constant 0 : index
    %c0_4 = arith.constant 0 : index
    %4 = vector.load %arg3[%c0_3, %c0_4] : memref<1x512xf32, #tpu.memory_space<vmem>>, vector<1x512xf32>
    %5 = vector.broadcast %4 : vector<1x512xf32> to vector<8x512xf32>
    %6 = arith.addf %3, %5 : vector<8x512xf32>
    %cst_5 = arith.constant 0.000000e+00 : f32
    %7 = vector.broadcast %cst_5 : f32 to vector<8x512xf32>
    %8 = arith.maximumf %6, %7 : vector<8x512xf32>
    %9 = arith.truncf %8 : vector<8x512xf32> to vector<8x512xbf16>
    %c0_6 = arith.constant 0 : index
    %c0_7 = arith.constant 0 : index
    %10 = vector.load %arg4[%c0_6, %c0_7] : memref<512x256xbf16, #tpu.memory_space<vmem>>, vector<512x256xbf16>
    %cst_8 = arith.constant dense<0.000000e+00> : vector<8x256xf32>
    %11 = tpu.matmul %9, %10, %cst_8 {dimension_numbers = #tpu.dot_dimension_numbers<[1], [0], [0], [1], [0, 0, 1, 1], [], []>} : vector<8x512xbf16>, vector<512x256xbf16>, vector<8x256xf32> -> vector<8x256xf32>
    %c0_9 = arith.constant 0 : index
    %c0_10 = arith.constant 0 : index
    %12 = vector.load %arg5[%c0_9, %c0_10] : memref<1x256xf32, #tpu.memory_space<vmem>>, vector<1x256xf32>
    %13 = vector.broadcast %12 : vector<1x256xf32> to vector<8x256xf32>
    %14 = arith.addf %11, %13 : vector<8x256xf32>
    %cst_11 = arith.constant 0.000000e+00 : f32
    %15 = vector.broadcast %cst_11 : f32 to vector<8x256xf32>
    %16 = arith.maximumf %14, %15 : vector<8x256xf32>
    %17 = arith.truncf %16 : vector<8x256xf32> to vector<8x256xbf16>
    %c0_12 = arith.constant 0 : index
    %c0_13 = arith.constant 0 : index
    %18 = vector.load %arg6[%c0_12, %c0_13] : memref<256x128xbf16, #tpu.memory_space<vmem>>, vector<256x128xbf16>
    %cst_14 = arith.constant dense<0.000000e+00> : vector<8x128xf32>
    %19 = tpu.matmul %17, %18, %cst_14 {dimension_numbers = #tpu.dot_dimension_numbers<[1], [0], [0], [1], [0, 0, 1, 1], [], []>} : vector<8x256xbf16>, vector<256x128xbf16>, vector<8x128xf32> -> vector<8x128xf32>
    %c0_15 = arith.constant 0 : index
    %c0_16 = arith.constant 0 : index
    %20 = vector.load %arg7[%c0_15, %c0_16] : memref<1x128xf32, #tpu.memory_space<vmem>>, vector<1x128xf32>
    %21 = vector.broadcast %20 : vector<1x128xf32> to vector<8x128xf32>
    %22 = arith.addf %19, %21 : vector<8x128xf32>
    %cst_17 = arith.constant 0.000000e+00 : f32
    %23 = vector.broadcast %cst_17 : f32 to vector<8x128xf32>
    %24 = arith.maximumf %22, %23 : vector<8x128xf32>
    %25 = arith.truncf %24 : vector<8x128xf32> to vector<8x128xbf16>
    %c0_18 = arith.constant 0 : index
    %c0_19 = arith.constant 0 : index
    %26 = vector.load %arg8[%c0_18, %c0_19] : memref<128x128xbf16, #tpu.memory_space<vmem>>, vector<128x128xbf16>
    %cst_20 = arith.constant dense<0.000000e+00> : vector<8x128xf32>
    %27 = tpu.matmul %25, %26, %cst_20 {dimension_numbers = #tpu.dot_dimension_numbers<[1], [0], [0], [1], [0, 0, 1, 1], [], []>} : vector<8x128xbf16>, vector<128x128xbf16>, vector<8x128xf32> -> vector<8x128xf32>
    %c0_21 = arith.constant 0 : index
    %c0_22 = arith.constant 0 : index
    %28 = vector.load %arg9[%c0_21, %c0_22] : memref<1x128xf32, #tpu.memory_space<vmem>>, vector<1x128xf32>
    %29 = vector.broadcast %28 : vector<1x128xf32> to vector<8x128xf32>
    %30 = arith.addf %27, %29 : vector<8x128xf32>
    %31 = arith.truncf %30 : vector<8x128xf32> to vector<8x128xbf16>
    %c0_23 = arith.constant 0 : index
    %c0_24 = arith.constant 0 : index
    %32 = vector.load %arg10[%c0_23, %c0_24] : memref<8x128xbf16, #tpu.memory_space<vmem>>, vector<8x128xbf16>
    tpu.vector_store %arg10[%c0_23, %c0_24], %31 {strides = array<i32>} : memref<8x128xbf16, #tpu.memory_space<vmem>>, vector<8x128xbf16>,
    return
  }
  func.func @transform_0(%arg0: i32) -> (i32, i32) {
    %c0_i32 = arith.constant 0 : i32
    %c0_i32_0 = arith.constant 0 : i32
    return %arg0, %c0_i32 : i32, i32
  }
  func.func @transform_1(%arg0: i32) -> (i32, i32) {
    %c0_i32 = arith.constant 0 : i32
    %c0_i32_0 = arith.constant 0 : i32
    %c0_i32_1 = arith.constant 0 : i32
    return %c0_i32, %c0_i32_0 : i32, i32
  }
  func.func @transform_2(%arg0: i32) -> (i32, i32) {
    %c0_i32 = arith.constant 0 : i32
    %c0_i32_0 = arith.constant 0 : i32
    %c0_i32_1 = arith.constant 0 : i32
    return %c0_i32, %c0_i32_0 : i32, i32
  }
  func.func @transform_3(%arg0: i32) -> (i32, i32) {
    %c0_i32 = arith.constant 0 : i32
    %c0_i32_0 = arith.constant 0 : i32
    %c0_i32_1 = arith.constant 0 : i32
    return %c0_i32, %c0_i32_0 : i32, i32
  }
  func.func @transform_4(%arg0: i32) -> (i32, i32) {
    %c0_i32 = arith.constant 0 : i32
    %c0_i32_0 = arith.constant 0 : i32
    %c0_i32_1 = arith.constant 0 : i32
    return %c0_i32, %c0_i32_0 : i32, i32
  }
  func.func @transform_5(%arg0: i32) -> (i32, i32) {
    %c0_i32 = arith.constant 0 : i32
    %c0_i32_0 = arith.constant 0 : i32
    %c0_i32_1 = arith.constant 0 : i32
    return %c0_i32, %c0_i32_0 : i32, i32
  }
  func.func @transform_6(%arg0: i32) -> (i32, i32) {
    %c0_i32 = arith.constant 0 : i32
    %c0_i32_0 = arith.constant 0 : i32
    %c0_i32_1 = arith.constant 0 : i32
    return %c0_i32, %c0_i32_0 : i32, i32
  }
  func.func @transform_7(%arg0: i32) -> (i32, i32) {
    %c0_i32 = arith.constant 0 : i32
    %c0_i32_0 = arith.constant 0 : i32
    %c0_i32_1 = arith.constant 0 : i32
    return %c0_i32, %c0_i32_0 : i32, i32
  }
  func.func @transform_8(%arg0: i32) -> (i32, i32) {
    %c0_i32 = arith.constant 0 : i32
    %c0_i32_0 = arith.constant 0 : i32
    %c0_i32_1 = arith.constant 0 : i32
    return %c0_i32, %c0_i32_0 : i32, i32
  }
  func.func @transform_9(%arg0: i32) -> (i32, i32) {
    %c0_i32 = arith.constant 0 : i32
    %c0_i32_0 = arith.constant 0 : i32
    return %arg0, %c0_i32 : i32, i32
  }
}

</mosaic_0001>

<llo_original>
// kernel: tpu_custom_call.1
$region0: #{tpu_custom_call.1}
  #allocation0 [shape = 'u32[]', space=smem, size = 0x4, offset = 0x4, fixed_abs, tag = 'smem constant byte address 0x4 - core index']
  #allocation1 [shape = 'u32[144,128]{1,0:T(1,128)}', space=vmem, size = 0x12000, scoped, tag = 'internal scratch']
  %s0 = inlined_call_operand.hbm [shape: f32[8,32], index: 0, kind: input, shape index: {}]
  %s1 = inlined_call_operand.hbm [shape: bf16[32,512], index: 1, kind: input, shape index: {}]
  %s2 = inlined_call_operand.vmem [shape: f32[1,512], index: 2, kind: input, shape index: {}]
  %s3 = inlined_call_operand.hbm [shape: bf16[512,256], index: 3, kind: input, shape index: {}]
  %s4 = inlined_call_operand.vmem [shape: f32[1,256], index: 4, kind: input, shape index: {}]
  %s5 = inlined_call_operand.hbm [shape: bf16[256,128], index: 5, kind: input, shape index: {}]
  %s6 = inlined_call_operand.vmem [shape: f32[1,128], index: 6, kind: input, shape index: {}]
  %s7 = inlined_call_operand.hbm [shape: bf16[128,128], index: 7, kind: input, shape index: {}]
  %s8 = inlined_call_operand.vmem [shape: f32[1,128], index: 8, kind: input, shape index: {}]
  %s9 = inlined_call_operand.hbm [shape: bf16[8,128], index: 9, kind: output, shape index: {}]
  %s10 = sld [smem:[#allocation0]]
  $region66: #{tpu_custom_call.1} parent=0
    _
  %s12 = ssub.s32 1, %s10
  %s13 = scalar_select 0, %s12, %s10
  $region1: #{tpu_custom_call.1} parent=0
    #allocation2 [shape = 'u8[4096]{0}', space=vmem, size = 0x1000, scoped, tag = 'input window, operand 0, single buffered']
    #allocation3 [shape = 's32[1]{0}', space=sflag, size = 0x4, scoped, tag = 'scoped memory for tpu_custom_call.1']
    #allocation4 [shape = 's32[1]{0}', space=sflag, size = 0x4, scoped, tag = 'scoped memory for tpu_custom_call.1']
    #allocation5 [shape = 'u8[32768]{0}', space=vmem, size = 0x8000, scoped, tag = 'input window, operand 1, single buffered']
    #allocation6 [shape = 's32[1]{0}', space=sflag, size = 0x4, scoped, tag = 'scoped memory for tpu_custom_call.1']
    #allocation7 [shape = 'u8[262144]{0}', space=vmem, size = 0x40000, scoped, tag = 'input window, operand 3, single buffered']
    #allocation8 [shape = 'u8[65536]{0}', space=vmem, size = 0x10000, scoped, tag = 'input window, operand 5, single buffered']
    #allocation9 [shape = 's32[1]{0}', space=sflag, size = 0x4, scoped, tag = 'scoped memory for tpu_custom_call.1']
    #allocation10 [shape = 'u8[32768]{0}', space=vmem, size = 0x8000, scoped, tag = 'input window, operand 7, single buffered']
    #allocation11 [shape = 'u8[2048]{0}', space=vmem, size = 0x800, scoped, tag = 'output window, operand 0, single buffered']
    %14 = vsyncpa [#allocation3], 0
    %15 = vsyncpa [#allocation6], 0
    %16 = vsyncpa [#allocation9], 0
    %17 = vsyncpa [#allocation4], 0
    // Predicated region
    $region2: #{tpu_custom_call.1} parent=1 // pred_check
      _
    $region3: #{tpu_custom_call.1} parent=1 // pred_check_branch
      %19 = sbr.rel (0) target = $region5
    $region4: #{tpu_custom_call.1} parent=1 // pred_region
      %s21 = ssub.s32 128, 128
      %22 = vsyncadd [#allocation3], %s21
      %s24 = sshll.u32 [#allocation2], 4
      %s25 = int_to_ptr.vmem [resolvable:$true] %s24
      %27 = dma.hbm_to_vmem [thread:$0]  %s0, 128, %s25, [#allocation3]
    $region5: #{tpu_custom_call.1} parent=1 // pred_fallthru
      _
    // Predicated region
    $region6: #{tpu_custom_call.1} parent=1 // pred_check
      _
    $region7: #{tpu_custom_call.1} parent=1 // pred_check_branch
      %29 = sbr.rel (0) target = $region9
    $region8: #{tpu_custom_call.1} parent=1 // pred_region
      %s31 = ssub.s32 1024, 1024
      %32 = vsyncadd [#allocation6], %s31
      %s33 = sshll.u32 [#allocation5], 4
      %s34 = int_to_ptr.vmem [resolvable:$true] %s33
      %39 = dma.hbm_to_vmem [thread:$0]  %s1, 1024, %s34, [#allocation6], 256, 256, 16
    $region9: #{tpu_custom_call.1} parent=1 // pred_fallthru
      _
    // Predicated region
    $region10: #{tpu_custom_call.1} parent=1 // pred_check
      _
    $region11: #{tpu_custom_call.1} parent=1 // pred_check_branch
      %41 = sbr.rel (0) target = $region13
    $region12: #{tpu_custom_call.1} parent=1 // pred_region
      _
    $region13: #{tpu_custom_call.1} parent=1 // pred_fallthru
      _
    // Predicated region
    $region14: #{tpu_custom_call.1} parent=1 // pred_check
      _
    $region15: #{tpu_custom_call.1} parent=1 // pred_check_branch
      %43 = sbr.rel (0) target = $region17
    $region16: #{tpu_custom_call.1} parent=1 // pred_region
      %s45 = ssub.s32 8192, 8192
      %46 = vsyncadd [#allocation6], %s45
      %s47 = sshll.u32 [#allocation7], 4
      %s48 = int_to_ptr.vmem [resolvable:$true] %s47
      %53 = dma.hbm_to_vmem [thread:$0]  %s3, 8192, %s48, [#allocation6], 128, 128, 8
    $region17: #{tpu_custom_call.1} parent=1 // pred_fallthru
      _
    // Predicated region
    $region18: #{tpu_custom_call.1} parent=1 // pred_check
      _
    $region19: #{tpu_custom_call.1} parent=1 // pred_check_branch
      %55 = sbr.rel (0) target = $region21
    $region20: #{tpu_custom_call.1} parent=1 // pred_region
      _
    $region21: #{tpu_custom_call.1} parent=1 // pred_fallthru
      _
    // Predicated region
    $region22: #{tpu_custom_call.1} parent=1 // pred_check
      _
    $region23: #{tpu_custom_call.1} parent=1 // pred_check_branch
      %57 = sbr.rel (0) target = $region25
    $region24: #{tpu_custom_call.1} parent=1 // pred_region
      %s59 = ssub.s32 2048, 2048
      %60 = vsyncadd [#allocation9], %s59
      %s61 = sshll.u32 [#allocation8], 4
      %s62 = int_to_ptr.vmem [resolvable:$true] %s61
      %67 = dma.hbm_to_vmem [thread:$0]  %s5, 2048, %s62, [#allocation9], 64, 64, 4
    $region25: #{tpu_custom_call.1} parent=1 // pred_fallthru
      _
    // Predicated region
    $region26: #{tpu_custom_call.1} parent=1 // pred_check
      _
    $region27: #{tpu_custom_call.1} parent=1 // pred_check_branch
      %69 = sbr.rel (0) target = $region29
    $region28: #{tpu_custom_call.1} parent=1 // pred_region
      _
    $region29: #{tpu_custom_call.1} parent=1 // pred_fallthru
      _
    // Predicated region
    $region30: #{tpu_custom_call.1} parent=1 // pred_check
      _
    $region31: #{tpu_custom_call.1} parent=1 // pred_check_branch
      %71 = sbr.rel (0) target = $region33
    $region32: #{tpu_custom_call.1} parent=1 // pred_region
      %s73 = ssub.s32 1024, 1024
      %74 = vsyncadd [#allocation9], %s73
      %s75 = sshll.u32 [#allocation10], 4
      %s76 = int_to_ptr.vmem [resolvable:$true] %s75
      %81 = dma.hbm_to_vmem [thread:$0]  %s7, 1024, %s76, [#allocation9], 64, 64, 4
    $region33: #{tpu_custom_call.1} parent=1 // pred_fallthru
      _
    // Predicated region
    $region34: #{tpu_custom_call.1} parent=1 // pred_check
      _
    $region35: #{tpu_custom_call.1} parent=1 // pred_check_branch
      %83 = sbr.rel (0) target = $region37
    $region36: #{tpu_custom_call.1} parent=1 // pred_region
      _
    $region37: #{tpu_custom_call.1} parent=1 // pred_fallthru
      _
    // Predicated region
    $region38: #{tpu_custom_call.1} parent=1 // pred_check
      _
    $region39: #{tpu_custom_call.1} parent=1 // pred_check_branch
      %85 = sbr.rel (0) target = $region41
    $region40: #{tpu_custom_call.1} parent=1 // pred_region
      %86 = dma.done [#allocation3], 128
    $region41: #{tpu_custom_call.1} parent=1 // pred_fallthru
      _
    // Predicated region
    $region42: #{tpu_custom_call.1} parent=1 // pred_check
      _
    $region43: #{tpu_custom_call.1} parent=1 // pred_check_branch
      %88 = sbr.rel (0) target = $region45
    $region44: #{tpu_custom_call.1} parent=1 // pred_region
      %89 = dma.done [#allocation6], 1024
    $region45: #{tpu_custom_call.1} parent=1 // pred_fallthru
      _
    // Predicated region
    $region46: #{tpu_custom_call.1} parent=1 // pred_check
      _
    $region47: #{tpu_custom_call.1} parent=1 // pred_check_branch
      %91 = sbr.rel (0) target = $region49
    $region48: #{tpu_custom_call.1} parent=1 // pred_region
      %92 = dma.done [#allocation6], 8192
    $region49: #{tpu_custom_call.1} parent=1 // pred_fallthru
      _
    // Predicated region
    $region50: #{tpu_custom_call.1} parent=1 // pred_check
      _
    $region51: #{tpu_custom_call.1} parent=1 // pred_check_branch
      %94 = sbr.rel (0) target = $region53
    $region52: #{tpu_custom_call.1} parent=1 // pred_region
      %95 = dma.done [#allocation9], 2048
    $region53: #{tpu_custom_call.1} parent=1 // pred_fallthru
      _
    // Predicated region
    $region54: #{tpu_custom_call.1} parent=1 // pred_check
      _
    $region55: #{tpu_custom_call.1} parent=1 // pred_check_branch
      %97 = sbr.rel (0) target = $region57
    $region56: #{tpu_custom_call.1} parent=1 // pred_region
      %98 = dma.done [#allocation9], 1024
    $region57: #{tpu_custom_call.1} parent=1 // pred_fallthru
      _
    %v100 = vld [vmem:[#allocation2] sm:$0xff]
    %v101 = vpack.c.bf16 %v100, %v100
    %v102 = vld [vmem:[#allocation5] sm:$0xff]
    %v103 = vld [vmem:[#allocation5 + $0x8] sm:$0xff]
    %v104 = vld [vmem:[#allocation5 + $0x10] sm:$0xff]
    %v105 = vld [vmem:[#allocation5 + $0x18] sm:$0xff]
    %v106 = vld [vmem:[#allocation5 + $0x20] sm:$0xff]
    %v107 = vld [vmem:[#allocation5 + $0x28] sm:$0xff]
    %v108 = vld [vmem:[#allocation5 + $0x30] sm:$0xff]
    %v109 = vld [vmem:[#allocation5 + $0x38] sm:$0xff]
    %v110 = vld [vmem:[%s2] sm:$0xf]
    %v112 = vlaneseq
    %v113 = vshrl.u32 %v112, 7
    %v114 = vsub.s32 0, %v113
    %v115 = vrot.slane %v110, %v114
    %v116 = vlaneseq
    %v117 = vshrl.u32 %v116, 7
    %v118 = vsub.s32 1, %v117
    %v119 = vrot.slane %v110, %v118
    %v120 = vlaneseq
    %v121 = vshrl.u32 %v120, 7
    %v122 = vsub.s32 2, %v121
    %v123 = vrot.slane %v110, %v122
    %v124 = vlaneseq
    %v125 = vshrl.u32 %v124, 7
    %v126 = vsub.s32 3, %v125
    %v127 = vrot.slane %v110, %v126
    %v140 = vunpack.c.l.b16 %v102
    %v141 = vunpack.c.h.b16 %v102
    %v142 = vunpack.c.l.b16 %v103
    %v143 = vunpack.c.h.b16 %v103
    %v144 = vunpack.c.l.b16 %v104
    %v145 = vunpack.c.h.b16 %v104
    %v146 = vunpack.c.l.b16 %v105
    %v147 = vunpack.c.h.b16 %v105
    %v148 = vunpack.c.l.b16 %v106
    %v149 = vunpack.c.h.b16 %v106
    %v150 = vunpack.c.l.b16 %v107
    %v151 = vunpack.c.h.b16 %v107
    %v152 = vunpack.c.l.b16 %v108
    %v153 = vunpack.c.h.b16 %v108
    %v154 = vunpack.c.l.b16 %v109
    %v155 = vunpack.c.h.b16 %v109
    %v156 = vpack.c.b16 %v144, %v140
    %v157 = vpack.c.b16 %v145, %v141
    %v158 = vpack.c.b16 %v146, %v142
    %v159 = vpack.c.b16 %v147, %v143
    %v160 = vpack.c.b16 %v152, %v148
    %v161 = vpack.c.b16 %v153, %v149
    %v162 = vpack.c.b16 %v154, %v150
    %v163 = vpack.c.b16 %v155, %v151
    %vm172 = vcmask 261120
    %v174 = vsel %vm172, %v101, 0
    %176 = vmatprep.subr.bf16.mxu0 %v157
    %177 = vmatpush1.bf16.msra.mxu0 %v156
    %178 = vmatprep.subr.bf16.mxu0 %v161
    %179 = vmatpush1.bf16.msra.mxu0 %v160
    %180 = vmatprep.subr.bf16.mxu0 0
    %181 = vmatpush1.bf16.msra.mxu0 0
    %182 = vmatprep.subr.bf16.mxu0 0
    %183 = vmatpush1.bf16.msra.mxu0 0
    %184 = vmatprep.subr.bf16.mxu0 0
    %185 = vmatpush1.bf16.msra.mxu0 0
    %186 = vmatprep.subr.bf16.mxu0 0
    %187 = vmatpush1.bf16.msra.mxu0 0
    %188 = vmatprep.subr.bf16.mxu0 0
    %189 = vmatpush1.bf16.msra.mxu0 0
    %190 = vmatprep.subr.bf16.mxu0 0
    %191 = vmatpush1.bf16.msra.mxu0 0
    %192 = vmatprep.subr.bf16.mxu0 0
    %193 = vmatpush1.bf16.msra.mxu0 0
    %194 = vmatprep.subr.bf16.mxu0 0
    %195 = vmatpush1.bf16.msra.mxu0 0
    %196 = vmatprep.subr.bf16.mxu0 0
    %197 = vmatpush1.bf16.msra.mxu0 0
    %198 = vmatprep.subr.bf16.mxu0 0
    %199 = vmatpush1.bf16.msra.mxu0 0
    %200 = vmatprep.subr.bf16.mxu0 0
    %201 = vmatpush1.bf16.msra.mxu0 0
    %202 = vmatprep.subr.bf16.mxu0 0
    %203 = vmatpush1.bf16.msra.mxu0 0
    %204 = vmatprep.subr.bf16.mxu0 0
    %205 = vmatpush1.bf16.msra.mxu0 0
    %206 = vmatprep.subr.bf16.mxu0 0
    %207 = vmatpush1.bf16.msra.mxu0 0
    %208 = vmatprep.mubr.bf16.mxu0 0
    %209 = vmatmul.mubr.bf16.gmra.mrb[0].mxu0 %v174
    %v210 = vpop.f32.mrb[0].mxu0
    %v211 = vadd.f32 %v115, %v210
    %v212 = vpop.f32.mrb[0].mxu0
    %v213 = vadd.f32 %v119, %v212
    %v214 = vpop.f32.mrb[0].mxu0
    %v215 = vpop.f32.mrb[0].mxu0
    %216 = vdwg.mxu0
    %217 = vmatprep.subr.bf16.mxu0 %v159
    %218 = vmatpush1.bf16.msra.mxu0 %v158
    %219 = vmatprep.subr.bf16.mxu0 %v163
    %220 = vmatpush1.bf16.msra.mxu0 %v162
    %221 = vmatprep.subr.bf16.mxu0 0
    %222 = vmatpush1.bf16.msra.mxu0 0
    %223 = vmatprep.subr.bf16.mxu0 0
    %224 = vmatpush1.bf16.msra.mxu0 0
    %225 = vmatprep.subr.bf16.mxu0 0
    %226 = vmatpush1.bf16.msra.mxu0 0
    %227 = vmatprep.subr.bf16.mxu0 0
    %228 = vmatpush1.bf16.msra.mxu0 0
    %229 = vmatprep.subr.bf16.mxu0 0
    %230 = vmatpush1.bf16.msra.mxu0 0
    %231 = vmatprep.subr.bf16.mxu0 0
    %232 = vmatpush1.bf16.msra.mxu0 0
    %233 = vmatprep.subr.bf16.mxu0 0
    %234 = vmatpush1.bf16.msra.mxu0 0
    %235 = vmatprep.subr.bf16.mxu0 0
    %236 = vmatpush1.bf16.msra.mxu0 0
    %237 = vmatprep.subr.bf16.mxu0 0
    %238 = vmatpush1.bf16.msra.mxu0 0
    %239 = vmatprep.subr.bf16.mxu0 0
    %240 = vmatpush1.bf16.msra.mxu0 0
    %241 = vmatprep.subr.bf16.mxu0 0
    %242 = vmatpush1.bf16.msra.mxu0 0
    %243 = vmatprep.subr.bf16.mxu0 0
    %244 = vmatpush1.bf16.msra.mxu0 0
    %245 = vmatprep.subr.bf16.mxu0 0
    %246 = vmatpush1.bf16.msra.mxu0 0
    %247 = vmatprep.subr.bf16.mxu0 0
    %248 = vmatpush1.bf16.msra.mxu0 0
    %249 = vmatprep.mubr.bf16.mxu0 0
    %250 = vmatmul.mubr.bf16.gmra.mrb[0].mxu0 %v174
    %v251 = vpop.f32.mrb[0].mxu0
    %v252 = vadd.f32 %v123, %v251
    %v253 = vpop.f32.mrb[0].mxu0
    %v254 = vadd.f32 %v127, %v253
    %v255 = vpop.f32.mrb[0].mxu0
    %v256 = vpop.f32.mrb[0].mxu0
    %257 = vdwg.mxu0
    %v258 = vmax.f32 %v211, 0.0
    %v259 = vmax.f32 %v213, 0.0
    %v260 = vmax.f32 %v252, 0.0
    %v261 = vmax.f32 %v254, 0.0
    %v262 = vpack.c.bf16 %v258, %v258
    %v263 = vpack.c.bf16 %v259, %v259
    %v264 = vpack.c.bf16 %v260, %v260
    %v265 = vpack.c.bf16 %v261, %v261
    %v266 = vld [vmem:[#allocation7] sm:$0xff]
    %v267 = vld [vmem:[#allocation7 + $0x8] sm:$0xff]
    %v268 = vld [vmem:[#allocation7 + $0x10] sm:$0xff]
    %v269 = vld [vmem:[#allocation7 + $0x18] sm:$0xff]
    %v270 = vld [vmem:[#allocation7 + $0x20] sm:$0xff]
    %v271 = vld [vmem:[#allocation7 + $0x28] sm:$0xff]
    %v272 = vld [vmem:[#allocation7 + $0x30] sm:$0xff]
    %v273 = vld [vmem:[#allocation7 + $0x38] sm:$0xff]
    %v274 = vld [vmem:[#allocation7 + $0x40] sm:$0xff]
    %v275 = vld [vmem:[#allocation7 + $0x48] sm:$0xff]
    %v276 = vld [vmem:[#allocation7 + $0x50] sm:$0xff]
    %v277 = vld [vmem:[#allocation7 + $0x58] sm:$0xff]
    %v278 = vld [vmem:[#allocation7 + $0x60] sm:$0xff]
    %v279 = vld [vmem:[#allocation7 + $0x68] sm:$0xff]
    %v280 = vld [vmem:[#allocation7 + $0x70] sm:$0xff]
    %v281 = vld [vmem:[#allocation7 + $0x78] sm:$0xff]
    %v282 = vld [vmem:[#allocation7 + $0x80] sm:$0xff]
    %v283 = vld [vmem:[#allocation7 + $0x88] sm:$0xff]
    %v284 = vld [vmem:[#allocation7 + $0x90] sm:$0xff]
    %v285 = vld [vmem:[#allocation7 + $0x98] sm:$0xff]
    %v286 = vld [vmem:[#allocation7 + $0xa0] sm:$0xff]
    %v287 = vld [vmem:[#allocation7 + $0xa8] sm:$0xff]
    %v288 = vld [vmem:[#allocation7 + $0xb0] sm:$0xff]
    %v289 = vld [vmem:[#allocation7 + $0xb8] sm:$0xff]
    %v290 = vld [vmem:[#allocation7 + $0xc0] sm:$0xff]
    %v291 = vld [vmem:[#allocation7 + $0xc8] sm:$0xff]
    %v292 = vld [vmem:[#allocation7 + $0xd0] sm:$0xff]
    %v293 = vld [vmem:[#allocation7 + $0xd8] sm:$0xff]
    %v294 = vld [vmem:[#allocation7 + $0xe0] sm:$0xff]
    %v295 = vld [vmem:[#allocation7 + $0xe8] sm:$0xff]
    %v296 = vld [vmem:[#allocation7 + $0xf0] sm:$0xff]
    %v297 = vld [vmem:[#allocation7 + $0xf8] sm:$0xff]
    %v298 = vld [vmem:[#allocation7 + $0x100] sm:$0xff]
    %v299 = vld [vmem:[#allocation7 + $0x108] sm:$0xff]
    %v300 = vld [vmem:[#allocation7 + $0x110] sm:$0xff]
    %v301 = vld [vmem:[#allocation7 + $0x118] sm:$0xff]
    %v302 = vld [vmem:[#allocation7 + $0x120] sm:$0xff]
    %v303 = vld [vmem:[#allocation7 + $0x128] sm:$0xff]
    %v304 = vld [vmem:[#allocation7 + $0x130] sm:$0xff]
    %v305 = vld [vmem:[#allocation7 + $0x138] sm:$0xff]
    %v306 = vld [vmem:[#allocation7 + $0x140] sm:$0xff]
    %v307 = vld [vmem:[#allocation7 + $0x148] sm:$0xff]
    %v308 = vld [vmem:[#allocation7 + $0x150] sm:$0xff]
    %v309 = vld [vmem:[#allocation7 + $0x158] sm:$0xff]
    %v310 = vld [vmem:[#allocation7 + $0x160] sm:$0xff]
    %v311 = vld [vmem:[#allocation7 + $0x168] sm:$0xff]
    %v312 = vld [vmem:[#allocation7 + $0x170] sm:$0xff]
    %v313 = vld [vmem:[#allocation7 + $0x178] sm:$0xff]
    %v314 = vld [vmem:[#allocation7 + $0x180] sm:$0xff]
    %v315 = vld [vmem:[#allocation7 + $0x188] sm:$0xff]
    %v316 = vld [vmem:[#allocation7 + $0x190] sm:$0xff]
    %v317 = vld [vmem:[#allocation7 + $0x198] sm:$0xff]
    %v318 = vld [vmem:[#allocation7 + $0x1a0] sm:$0xff]
    %v319 = vld [vmem:[#allocation7 + $0x1a8] sm:$0xff]
    %v320 = vld [vmem:[#allocation7 + $0x1b0] sm:$0xff]
    %v321 = vld [vmem:[#allocation7 + $0x1b8] sm:$0xff]
    %v322 = vld [vmem:[#allocation7 + $0x1c0] sm:$0xff]
    %v323 = vld [vmem:[#allocation7 + $0x1c8] sm:$0xff]
    %v324 = vld [vmem:[#allocation7 + $0x1d0] sm:$0xff]
    %v325 = vld [vmem:[#allocation7 + $0x1d8] sm:$0xff]
    %v326 = vld [vmem:[#allocation7 + $0x1e0] sm:$0xff]
    %v327 = vld [vmem:[#allocation7 + $0x1e8] sm:$0xff]
    %v328 = vld [vmem:[#allocation7 + $0x1f0] sm:$0xff]
    %v329 = vld [vmem:[#allocation7 + $0x1f8] sm:$0xff]
    %v330 = vld [vmem:[%s4] sm:$0x3]
    %v332 = vlaneseq
    %v333 = vshrl.u32 %v332, 7
    %v334 = vsub.s32 0, %v333
    %v335 = vrot.slane %v330, %v334
    %v336 = vlaneseq
    %v337 = vshrl.u32 %v336, 7
    %v338 = vsub.s32 1, %v337
    %v339 = vrot.slane %v330, %v338
    %v406 = vunpack.c.l.b16 %v266
    %v407 = vunpack.c.h.b16 %v266
    %v408 = vunpack.c.l.b16 %v267
    %v409 = vunpack.c.h.b16 %v267
    %v410 = vunpack.c.l.b16 %v268
    %v411 = vunpack.c.h.b16 %v268
    %v412 = vunpack.c.l.b16 %v269
    %v413 = vunpack.c.h.b16 %v269
    %v414 = vunpack.c.l.b16 %v270
    %v415 = vunpack.c.h.b16 %v270
    %v416 = vunpack.c.l.b16 %v271
    %v417 = vunpack.c.h.b16 %v271
    %v418 = vunpack.c.l.b16 %v272
    %v419 = vunpack.c.h.b16 %v272
    %v420 = vunpack.c.l.b16 %v273
    %v421 = vunpack.c.h.b16 %v273
    %v422 = vunpack.c.l.b16 %v274
    %v423 = vunpack.c.h.b16 %v274
    %v424 = vunpack.c.l.b16 %v275
    %v425 = vunpack.c.h.b16 %v275
    %v426 = vunpack.c.l.b16 %v276
    %v427 = vunpack.c.h.b16 %v276
    %v428 = vunpack.c.l.b16 %v277
    %v429 = vunpack.c.h.b16 %v277
    %v430 = vunpack.c.l.b16 %v278
    %v431 = vunpack.c.h.b16 %v278
    %v432 = vunpack.c.l.b16 %v279
    %v433 = vunpack.c.h.b16 %v279
    %v434 = vunpack.c.l.b16 %v280
    %v435 = vunpack.c.h.b16 %v280
    %v436 = vunpack.c.l.b16 %v281
    %v437 = vunpack.c.h.b16 %v281
    %v438 = vunpack.c.l.b16 %v282
    %v439 = vunpack.c.h.b16 %v282
    %v440 = vunpack.c.l.b16 %v283
    %v441 = vunpack.c.h.b16 %v283
    %v442 = vunpack.c.l.b16 %v284
    %v443 = vunpack.c.h.b16 %v284
    %v444 = vunpack.c.l.b16 %v285
    %v445 = vunpack.c.h.b16 %v285
    %v446 = vunpack.c.l.b16 %v286
    %v447 = vunpack.c.h.b16 %v286
    %v448 = vunpack.c.l.b16 %v287
    %v449 = vunpack.c.h.b16 %v287
    %v450 = vunpack.c.l.b16 %v288
    %v451 = vunpack.c.h.b16 %v288
    %v452 = vunpack.c.l.b16 %v289
    %v453 = vunpack.c.h.b16 %v289
    %v454 = vunpack.c.l.b16 %v290
    %v455 = vunpack.c.h.b16 %v290
    %v456 = vunpack.c.l.b16 %v291
    %v457 = vunpack.c.h.b16 %v291
    %v458 = vunpack.c.l.b16 %v292
    %v459 = vunpack.c.h.b16 %v292
    %v460 = vunpack.c.l.b16 %v293
    %v461 = vunpack.c.h.b16 %v293
    %v462 = vunpack.c.l.b16 %v294
    %v463 = vunpack.c.h.b16 %v294
    %v464 = vunpack.c.l.b16 %v295
    %v465 = vunpack.c.h.b16 %v295
    %v466 = vunpack.c.l.b16 %v296
    %v467 = vunpack.c.h.b16 %v296
    %v468 = vunpack.c.l.b16 %v297
    %v469 = vunpack.c.h.b16 %v297
    %v470 = vunpack.c.l.b16 %v298
    %v471 = vunpack.c.h.b16 %v298
    %v472 = vunpack.c.l.b16 %v299
    %v473 = vunpack.c.h.b16 %v299
    %v474 = vunpack.c.l.b16 %v300
    %v475 = vunpack.c.h.b16 %v300
    %v476 = vunpack.c.l.b16 %v301
    %v477 = vunpack.c.h.b16 %v301
    %v478 = vunpack.c.l.b16 %v302
    %v479 = vunpack.c.h.b16 %v302
    %v480 = vunpack.c.l.b16 %v303
    %v481 = vunpack.c.h.b16 %v303
    %v482 = vunpack.c.l.b16 %v304
    %v483 = vunpack.c.h.b16 %v304
    %v484 = vunpack.c.l.b16 %v305
    %v485 = vunpack.c.h.b16 %v305
    %v486 = vunpack.c.l.b16 %v306
    %v487 = vunpack.c.h.b16 %v306
    %v488 = vunpack.c.l.b16 %v307
    %v489 = vunpack.c.h.b16 %v307
    %v490 = vunpack.c.l.b16 %v308
    %v491 = vunpack.c.h.b16 %v308
    %v492 = vunpack.c.l.b16 %v309
    %v493 = vunpack.c.h.b16 %v309
    %v494 = vunpack.c.l.b16 %v310
    %v495 = vunpack.c.h.b16 %v310
    %v496 = vunpack.c.l.b16 %v311
    %v497 = vunpack.c.h.b16 %v311
    %v498 = vunpack.c.l.b16 %v312
    %v499 = vunpack.c.h.b16 %v312
    %v500 = vunpack.c.l.b16 %v313
    %v501 = vunpack.c.h.b16 %v313
    %v502 = vunpack.c.l.b16 %v314
    %v503 = vunpack.c.h.b16 %v314
    %v504 = vunpack.c.l.b16 %v315
    %v505 = vunpack.c.h.b16 %v315
    %v506 = vunpack.c.l.b16 %v316
    %v507 = vunpack.c.h.b16 %v316
    %v508 = vunpack.c.l.b16 %v317
    %v509 = vunpack.c.h.b16 %v317
    %v510 = vunpack.c.l.b16 %v318
    %v511 = vunpack.c.h.b16 %v318
    %v512 = vunpack.c.l.b16 %v319
    %v513 = vunpack.c.h.b16 %v319
    %v514 = vunpack.c.l.b16 %v320
    %v515 = vunpack.c.h.b16 %v320
    %v516 = vunpack.c.l.b16 %v321
    %v517 = vunpack.c.h.b16 %v321
    %v518 = vunpack.c.l.b16 %v322
    %v519 = vunpack.c.h.b16 %v322
    %v520 = vunpack.c.l.b16 %v323
    %v521 = vunpack.c.h.b16 %v323
    %v522 = vunpack.c.l.b16 %v324
    %v523 = vunpack.c.h.b16 %v324
    %v524 = vunpack.c.l.b16 %v325
    %v525 = vunpack.c.h.b16 %v325
    %v526 = vunpack.c.l.b16 %v326
    %v527 = vunpack.c.h.b16 %v326
    %v528 = vunpack.c.l.b16 %v327
    %v529 = vunpack.c.h.b16 %v327
    %v530 = vunpack.c.l.b16 %v328
    %v531 = vunpack.c.h.b16 %v328
    %v532 = vunpack.c.l.b16 %v329
    %v533 = vunpack.c.h.b16 %v329
    %v534 = vpack.c.b16 %v408, %v406
    %v535 = vpack.c.b16 %v409, %v407
    %v536 = vpack.c.b16 %v412, %v410
    %v537 = vpack.c.b16 %v413, %v411
    %v538 = vpack.c.b16 %v416, %v414
    %v539 = vpack.c.b16 %v417, %v415
    %v540 = vpack.c.b16 %v420, %v418
    %v541 = vpack.c.b16 %v421, %v419
    %v542 = vpack.c.b16 %v424, %v422
    %v543 = vpack.c.b16 %v425, %v423
    %v544 = vpack.c.b16 %v428, %v426
    %v545 = vpack.c.b16 %v429, %v427
    %v546 = vpack.c.b16 %v432, %v430
    %v547 = vpack.c.b16 %v433, %v431
    %v548 = vpack.c.b16 %v436, %v434
    %v549 = vpack.c.b16 %v437, %v435
    %v550 = vpack.c.b16 %v440, %v438
    %v551 = vpack.c.b16 %v441, %v439
    %v552 = vpack.c.b16 %v444, %v442
    %v553 = vpack.c.b16 %v445, %v443
    %v554 = vpack.c.b16 %v448, %v446
    %v555 = vpack.c.b16 %v449, %v447
    %v556 = vpack.c.b16 %v452, %v450
    %v557 = vpack.c.b16 %v453, %v451
    %v558 = vpack.c.b16 %v456, %v454
    %v559 = vpack.c.b16 %v457, %v455
    %v560 = vpack.c.b16 %v460, %v458
    %v561 = vpack.c.b16 %v461, %v459
    %v562 = vpack.c.b16 %v464, %v462
    %v563 = vpack.c.b16 %v465, %v463
    %v564 = vpack.c.b16 %v468, %v466
    %v565 = vpack.c.b16 %v469, %v467
    %v566 = vpack.c.b16 %v472, %v470
    %v567 = vpack.c.b16 %v473, %v471
    %v568 = vpack.c.b16 %v476, %v474
    %v569 = vpack.c.b16 %v477, %v475
    %v570 = vpack.c.b16 %v480, %v478
    %v571 = vpack.c.b16 %v481, %v479
    %v572 = vpack.c.b16 %v484, %v482
    %v573 = vpack.c.b16 %v485, %v483
    %v574 = vpack.c.b16 %v488, %v486
    %v575 = vpack.c.b16 %v489, %v487
    %v576 = vpack.c.b16 %v492, %v490
    %v577 = vpack.c.b16 %v493, %v491
    %v578 = vpack.c.b16 %v496, %v494
    %v579 = vpack.c.b16 %v497, %v495
    %v580 = vpack.c.b16 %v500, %v498
    %v581 = vpack.c.b16 %v501, %v499
    %v582 = vpack.c.b16 %v504, %v502
    %v583 = vpack.c.b16 %v505, %v503
    %v584 = vpack.c.b16 %v508, %v506
    %v585 = vpack.c.b16 %v509, %v507
    %v586 = vpack.c.b16 %v512, %v510
    %v587 = vpack.c.b16 %v513, %v511
    %v588 = vpack.c.b16 %v516, %v514
    %v589 = vpack.c.b16 %v517, %v515
    %v590 = vpack.c.b16 %v520, %v518
    %v591 = vpack.c.b16 %v521, %v519
    %v592 = vpack.c.b16 %v524, %v522
    %v593 = vpack.c.b16 %v525, %v523
    %v594 = vpack.c.b16 %v528, %v526
    %v595 = vpack.c.b16 %v529, %v527
    %v596 = vpack.c.b16 %v532, %v530
    %v597 = vpack.c.b16 %v533, %v531
    %662 = vmatprep.subr.bf16.mxu0 %v535
    %663 = vmatpush1.bf16.msra.mxu0 %v534
    %664 = vmatprep.subr.bf16.mxu0 %v537
    %665 = vmatpush1.bf16.msra.mxu0 %v536
    %666 = vmatprep.subr.bf16.mxu0 %v539
    %667 = vmatpush1.bf16.msra.mxu0 %v538
    %668 = vmatprep.subr.bf16.mxu0 %v541
    %669 = vmatpush1.bf16.msra.mxu0 %v540
    %670 = vmatprep.subr.bf16.mxu0 %v543
    %671 = vmatpush1.bf16.msra.mxu0 %v542
    %672 = vmatprep.subr.bf16.mxu0 %v545
    %673 = vmatpush1.bf16.msra.mxu0 %v544
    %674 = vmatprep.subr.bf16.mxu0 %v547
    %675 = vmatpush1.bf16.msra.mxu0 %v546
    %676 = vmatprep.subr.bf16.mxu0 %v549
    %677 = vmatpush1.bf16.msra.mxu0 %v548
    %678 = vmatprep.subr.bf16.mxu0 %v551
    %679 = vmatpush1.bf16.msra.mxu0 %v550
    %680 = vmatprep.subr.bf16.mxu0 %v553
    %681 = vmatpush1.bf16.msra.mxu0 %v552
    %682 = vmatprep.subr.bf16.mxu0 %v555
    %683 = vmatpush1.bf16.msra.mxu0 %v554
    %684 = vmatprep.subr.bf16.mxu0 %v557
    %685 = vmatpush1.bf16.msra.mxu0 %v556
    %686 = vmatprep.subr.bf16.mxu0 %v559
    %687 = vmatpush1.bf16.msra.mxu0 %v558
    %688 = vmatprep.subr.bf16.mxu0 %v561
    %689 = vmatpush1.bf16.msra.mxu0 %v560
    %690 = vmatprep.subr.bf16.mxu0 %v563
    %691 = vmatpush1.bf16.msra.mxu0 %v562
    %692 = vmatprep.subr.bf16.mxu0 %v565
    %693 = vmatpush1.bf16.msra.mxu0 %v564
    %694 = vmatprep.mubr.bf16.mxu0 %v263
    %695 = vmatmul.mubr.bf16.gmra.mrb[0].mxu0 %v262
    %v696 = vpop.f32.mrb[0].mxu0
    %v697 = vadd.f32 %v335, %v696
    %v698 = vpop.f32.mrb[0].mxu0
    %v699 = vadd.f32 %v339, %v698
    %v700 = vpop.f32.mrb[0].mxu0
    %v701 = vpop.f32.mrb[0].mxu0
    %702 = vdwg.mxu0
    %703 = vmatprep.subr.bf16.mxu0 %v567
    %704 = vmatpush1.bf16.msra.mxu0 %v566
    %705 = vmatprep.subr.bf16.mxu0 %v569
    %706 = vmatpush1.bf16.msra.mxu0 %v568
    %707 = vmatprep.subr.bf16.mxu0 %v571
    %708 = vmatpush1.bf16.msra.mxu0 %v570
    %709 = vmatprep.subr.bf16.mxu0 %v573
    %710 = vmatpush1.bf16.msra.mxu0 %v572
    %711 = vmatprep.subr.bf16.mxu0 %v575
    %712 = vmatpush1.bf16.msra.mxu0 %v574
    %713 = vmatprep.subr.bf16.mxu0 %v577
    %714 = vmatpush1.bf16.msra.mxu0 %v576
    %715 = vmatprep.subr.bf16.mxu0 %v579
    %716 = vmatpush1.bf16.msra.mxu0 %v578
    %717 = vmatprep.subr.bf16.mxu0 %v581
    %718 = vmatpush1.bf16.msra.mxu0 %v580
    %719 = vmatprep.subr.bf16.mxu0 %v583
    %720 = vmatpush1.bf16.msra.mxu0 %v582
    %721 = vmatprep.subr.bf16.mxu0 %v585
    %722 = vmatpush1.bf16.msra.mxu0 %v584
    %723 = vmatprep.subr.bf16.mxu0 %v587
    %724 = vmatpush1.bf16.msra.mxu0 %v586
    %725 = vmatprep.subr.bf16.mxu0 %v589
    %726 = vmatpush1.bf16.msra.mxu0 %v588
    %727 = vmatprep.subr.bf16.mxu0 %v591
    %728 = vmatpush1.bf16.msra.mxu0 %v590
    %729 = vmatprep.subr.bf16.mxu0 %v593
    %730 = vmatpush1.bf16.msra.mxu0 %v592
    %731 = vmatprep.subr.bf16.mxu0 %v595
    %732 = vmatpush1.bf16.msra.mxu0 %v594
    %733 = vmatprep.subr.bf16.mxu0 %v597
    %734 = vmatpush1.bf16.msra.mxu0 %v596
    %735 = vmatprep.mubr.bf16.mxu0 %v265
    %736 = vmatmul.mubr.bf16.gmra.mrb[0].mxu0 %v264
    %v737 = vpop.f32.mrb[0].mxu0
    %v738 = vadd.f32 %v697, %v737
    %v739 = vpop.f32.mrb[0].mxu0
    %v740 = vadd.f32 %v699, %v739
    %v741 = vpop.f32.mrb[0].mxu0
    %v742 = vpop.f32.mrb[0].mxu0
    %743 = vdwg.mxu0
    %v744 = vmax.f32 %v738, 0.0
    %v745 = vmax.f32 %v740, 0.0
    %v746 = vpack.c.bf16 %v744, %v744
    %v747 = vpack.c.bf16 %v745, %v745
    %v748 = vld [vmem:[#allocation8] sm:$0xf]
    %v749 = vld [vmem:[#allocation8 + $0x4] sm:$0xf]
    %v750 = vld [vmem:[#allocation8 + $0x8] sm:$0xf]
    %v751 = vld [vmem:[#allocation8 + $0xc] sm:$0xf]
    %v752 = vld [vmem:[#allocation8 + $0x10] sm:$0xf]
    %v753 = vld [vmem:[#allocation8 + $0x14] sm:$0xf]
    %v754 = vld [vmem:[#allocation8 + $0x18] sm:$0xf]
    %v755 = vld [vmem:[#allocation8 + $0x1c] sm:$0xf]
    %v756 = vld [vmem:[#allocation8 + $0x20] sm:$0xf]
    %v757 = vld [vmem:[#allocation8 + $0x24] sm:$0xf]
    %v758 = vld [vmem:[#allocation8 + $0x28] sm:$0xf]
    %v759 = vld [vmem:[#allocation8 + $0x2c] sm:$0xf]
    %v760 = vld [vmem:[#allocation8 + $0x30] sm:$0xf]
    %v761 = vld [vmem:[#allocation8 + $0x34] sm:$0xf]
    %v762 = vld [vmem:[#allocation8 + $0x38] sm:$0xf]
    %v763 = vld [vmem:[#allocation8 + $0x3c] sm:$0xf]
    %v764 = vld [vmem:[#allocation8 + $0x40] sm:$0xf]
    %v765 = vld [vmem:[#allocation8 + $0x44] sm:$0xf]
    %v766 = vld [vmem:[#allocation8 + $0x48] sm:$0xf]
    %v767 = vld [vmem:[#allocation8 + $0x4c] sm:$0xf]
    %v768 = vld [vmem:[#allocation8 + $0x50] sm:$0xf]
    %v769 = vld [vmem:[#allocation8 + $0x54] sm:$0xf]
    %v770 = vld [vmem:[#allocation8 + $0x58] sm:$0xf]
    %v771 = vld [vmem:[#allocation8 + $0x5c] sm:$0xf]
    %v772 = vld [vmem:[#allocation8 + $0x60] sm:$0xf]
    %v773 = vld [vmem:[#allocation8 + $0x64] sm:$0xf]
    %v774 = vld [vmem:[#allocation8 + $0x68] sm:$0xf]
    %v775 = vld [vmem:[#allocation8 + $0x6c] sm:$0xf]
    %v776 = vld [vmem:[#allocation8 + $0x70] sm:$0xf]
    %v777 = vld [vmem:[#allocation8 + $0x74] sm:$0xf]
    %v778 = vld [vmem:[#allocation8 + $0x78] sm:$0xf]
    %v779 = vld [vmem:[#allocation8 + $0x7c] sm:$0xf]
    %v780 = vld [vmem:[%s6] sm:$0x1]
    %v782 = vlaneseq
    %v783 = vshrl.u32 %v782, 7
    %v784 = vsub.s32 0, %v783
    %v785 = vrot.slane %v780, %v784
    %v819 = vunpack.c.l.b16 %v748
    %v820 = vunpack.c.l.b16 %v749
    %v821 = vunpack.c.l.b16 %v750
    %v822 = vunpack.c.l.b16 %v751
    %v823 = vunpack.c.l.b16 %v752
    %v824 = vunpack.c.l.b16 %v753
    %v825 = vunpack.c.l.b16 %v754
    %v826 = vunpack.c.l.b16 %v755
    %v827 = vunpack.c.l.b16 %v756
    %v828 = vunpack.c.l.b16 %v757
    %v829 = vunpack.c.l.b16 %v758
    %v830 = vunpack.c.l.b16 %v759
    %v831 = vunpack.c.l.b16 %v760
    %v832 = vunpack.c.l.b16 %v761
    %v833 = vunpack.c.l.b16 %v762
    %v834 = vunpack.c.l.b16 %v763
    %v835 = vunpack.c.l.b16 %v764
    %v836 = vunpack.c.l.b16 %v765
    %v837 = vunpack.c.l.b16 %v766
    %v838 = vunpack.c.l.b16 %v767
    %v839 = vunpack.c.l.b16 %v768
    %v840 = vunpack.c.l.b16 %v769
    %v841 = vunpack.c.l.b16 %v770
    %v842 = vunpack.c.l.b16 %v771
    %v843 = vunpack.c.l.b16 %v772
    %v844 = vunpack.c.l.b16 %v773
    %v845 = vunpack.c.l.b16 %v774
    %v846 = vunpack.c.l.b16 %v775
    %v847 = vunpack.c.l.b16 %v776
    %v848 = vunpack.c.l.b16 %v777
    %v849 = vunpack.c.l.b16 %v778
    %v850 = vunpack.c.l.b16 %v779
    %v851 = vpack.c.b16 %v820, %v819
    %v852 = vpack.c.b16 %v822, %v821
    %v853 = vpack.c.b16 %v824, %v823
    %v854 = vpack.c.b16 %v826, %v825
    %v855 = vpack.c.b16 %v828, %v827
    %v856 = vpack.c.b16 %v830, %v829
    %v857 = vpack.c.b16 %v832, %v831
    %v858 = vpack.c.b16 %v834, %v833
    %v859 = vpack.c.b16 %v836, %v835
    %v860 = vpack.c.b16 %v838, %v837
    %v861 = vpack.c.b16 %v840, %v839
    %v862 = vpack.c.b16 %v842, %v841
    %v863 = vpack.c.b16 %v844, %v843
    %v864 = vpack.c.b16 %v846, %v845
    %v865 = vpack.c.b16 %v848, %v847
    %v866 = vpack.c.b16 %v850, %v849
    %883 = vmatprep.subr.bf16.mxu0 0
    %884 = vmatpush1.bf16.msra.mxu0 %v851
    %885 = vmatprep.subr.bf16.mxu0 0
    %886 = vmatpush1.bf16.msra.mxu0 %v852
    %887 = vmatprep.subr.bf16.mxu0 0
    %888 = vmatpush1.bf16.msra.mxu0 %v853
    %889 = vmatprep.subr.bf16.mxu0 0
    %890 = vmatpush1.bf16.msra.mxu0 %v854
    %891 = vmatprep.subr.bf16.mxu0 0
    %892 = vmatpush1.bf16.msra.mxu0 %v855
    %893 = vmatprep.subr.bf16.mxu0 0
    %894 = vmatpush1.bf16.msra.mxu0 %v856
    %895 = vmatprep.subr.bf16.mxu0 0
    %896 = vmatpush1.bf16.msra.mxu0 %v857
    %897 = vmatprep.subr.bf16.mxu0 0
    %898 = vmatpush1.bf16.msra.mxu0 %v858
    %899 = vmatprep.subr.bf16.mxu0 0
    %900 = vmatpush1.bf16.msra.mxu0 %v859
    %901 = vmatprep.subr.bf16.mxu0 0
    %902 = vmatpush1.bf16.msra.mxu0 %v860
    %903 = vmatprep.subr.bf16.mxu0 0
    %904 = vmatpush1.bf16.msra.mxu0 %v861
    %905 = vmatprep.subr.bf16.mxu0 0
    %906 = vmatpush1.bf16.msra.mxu0 %v862
    %907 = vmatprep.subr.bf16.mxu0 0
    %908 = vmatpush1.bf16.msra.mxu0 %v863
    %909 = vmatprep.subr.bf16.mxu0 0
    %910 = vmatpush1.bf16.msra.mxu0 %v864
    %911 = vmatprep.subr.bf16.mxu0 0
    %912 = vmatpush1.bf16.msra.mxu0 %v865
    %913 = vmatprep.subr.bf16.mxu0 0
    %914 = vmatpush1.bf16.msra.mxu0 %v866
    %915 = vmatprep.mubr.bf16.mxu0 %v747
    %916 = vmatmul.mubr.bf16.gmra.mrb[0].mxu0 %v746
    %v917 = vpop.f32.mrb[0].mxu0
    %v918 = vadd.f32 %v785, %v917
    %v919 = vpop.f32.mrb[0].mxu0
    %v920 = vpop.f32.mrb[0].mxu0
    %v921 = vpop.f32.mrb[0].mxu0
    %922 = vdwg.mxu0
    %v923 = vmax.f32 %v918, 0.0
    %v924 = vpack.c.bf16 %v923, %v923
    %v925 = vld [vmem:[#allocation10] sm:$0xf]
    %v926 = vld [vmem:[#allocation10 + $0x4] sm:$0xf]
    %v927 = vld [vmem:[#allocation10 + $0x8] sm:$0xf]
    %v928 = vld [vmem:[#allocation10 + $0xc] sm:$0xf]
    %v929 = vld [vmem:[#allocation10 + $0x10] sm:$0xf]
    %v930 = vld [vmem:[#allocation10 + $0x14] sm:$0xf]
    %v931 = vld [vmem:[#allocation10 + $0x18] sm:$0xf]
    %v932 = vld [vmem:[#allocation10 + $0x1c] sm:$0xf]
    %v933 = vld [vmem:[#allocation10 + $0x20] sm:$0xf]
    %v934 = vld [vmem:[#allocation10 + $0x24] sm:$0xf]
    %v935 = vld [vmem:[#allocation10 + $0x28] sm:$0xf]
    %v936 = vld [vmem:[#allocation10 + $0x2c] sm:$0xf]
    %v937 = vld [vmem:[#allocation10 + $0x30] sm:$0xf]
    %v938 = vld [vmem:[#allocation10 + $0x34] sm:$0xf]
    %v939 = vld [vmem:[#allocation10 + $0x38] sm:$0xf]
    %v940 = vld [vmem:[#allocation10 + $0x3c] sm:$0xf]
    %v941 = vld [vmem:[%s8] sm:$0x1]
    %v943 = vlaneseq
    %v944 = vshrl.u32 %v943, 7
    %v945 = vsub.s32 0, %v944
    %v946 = vrot.slane %v941, %v945
    %v964 = vunpack.c.l.b16 %v925
    %v965 = vunpack.c.l.b16 %v926
    %v966 = vunpack.c.l.b16 %v927
    %v967 = vunpack.c.l.b16 %v928
    %v968 = vunpack.c.l.b16 %v929
    %v969 = vunpack.c.l.b16 %v930
    %v970 = vunpack.c.l.b16 %v931
    %v971 = vunpack.c.l.b16 %v932
    %v972 = vunpack.c.l.b16 %v933
    %v973 = vunpack.c.l.b16 %v934
    %v974 = vunpack.c.l.b16 %v935
    %v975 = vunpack.c.l.b16 %v936
    %v976 = vunpack.c.l.b16 %v937
    %v977 = vunpack.c.l.b16 %v938
    %v978 = vunpack.c.l.b16 %v939
    %v979 = vunpack.c.l.b16 %v940
    %v980 = vpack.c.b16 %v965, %v964
    %v981 = vpack.c.b16 %v967, %v966
    %v982 = vpack.c.b16 %v969, %v968
    %v983 = vpack.c.b16 %v971, %v970
    %v984 = vpack.c.b16 %v973, %v972
    %v985 = vpack.c.b16 %v975, %v974
    %v986 = vpack.c.b16 %v977, %v976
    %v987 = vpack.c.b16 %v979, %v978
    %996 = vmatprep.subr.bf16.mxu0 0
    %997 = vmatpush1.bf16.msra.mxu0 %v980
    %998 = vmatprep.subr.bf16.mxu0 0
    %999 = vmatpush1.bf16.msra.mxu0 %v981
    %1000 = vmatprep.subr.bf16.mxu0 0
    %1001 = vmatpush1.bf16.msra.mxu0 %v982
    %1002 = vmatprep.subr.bf16.mxu0 0
    %1003 = vmatpush1.bf16.msra.mxu0 %v983
    %1004 = vmatprep.subr.bf16.mxu0 0
    %1005 = vmatpush1.bf16.msra.mxu0 %v984
    %1006 = vmatprep.subr.bf16.mxu0 0
    %1007 = vmatpush1.bf16.msra.mxu0 %v985
    %1008 = vmatprep.subr.bf16.mxu0 0
    %1009 = vmatpush1.bf16.msra.mxu0 %v986
    %1010 = vmatprep.subr.bf16.mxu0 0
    %1011 = vmatpush1.bf16.msra.mxu0 %v987
    %1012 = vmatprep.subr.bf16.mxu0 0
    %1013 = vmatpush1.bf16.msra.mxu0 0
    %1014 = vmatprep.subr.bf16.mxu0 0
    %1015 = vmatpush1.bf16.msra.mxu0 0
    %1016 = vmatprep.subr.bf16.mxu0 0
    %1017 = vmatpush1.bf16.msra.mxu0 0
    %1018 = vmatprep.subr.bf16.mxu0 0
    %1019 = vmatpush1.bf16.msra.mxu0 0
    %1020 = vmatprep.subr.bf16.mxu0 0
    %1021 = vmatpush1.bf16.msra.mxu0 0
    %1022 = vmatprep.subr.bf16.mxu0 0
    %1023 = vmatpush1.bf16.msra.mxu0 0
    %1024 = vmatprep.subr.bf16.mxu0 0
    %1025 = vmatpush1.bf16.msra.mxu0 0
    %1026 = vmatprep.subr.bf16.mxu0 0
    %1027 = vmatpush1.bf16.msra.mxu0 0
    %1028 = vmatprep.mubr.bf16.mxu0 0
    %1029 = vmatmul.mubr.bf16.gmra.mrb[0].mxu0 %v924
    %v1030 = vpop.f32.mrb[0].mxu0
    %v1031 = vadd.f32 %v946, %v1030
    %v1032 = vpop.f32.mrb[0].mxu0
    %v1033 = vpop.f32.mrb[0].mxu0
    %v1034 = vpop.f32.mrb[0].mxu0
    %1035 = vdwg.mxu0
    %v1036 = vpack.c.bf16 %v1031, %v1031
    %1037 = vst [vmem:[#allocation11] sm:$0xf] %v1036
    // Predicated region
    $region58: #{tpu_custom_call.1} parent=1 // pred_check
      _
    $region59: #{tpu_custom_call.1} parent=1 // pred_check_branch
      %1039 = sbr.rel (0) target = $region61
    $region60: #{tpu_custom_call.1} parent=1 // pred_region
      %s1041 = ssub.s32 64, 64
      %1042 = vsyncadd [#allocation4], %s1041
      %s1044 = sshll.u32 [#allocation11], 4
      %s1045 = int_to_ptr.vmem [resolvable:$true] %s1044
      %1047 = dma.vmem_to_hbm [thread:$0]  %s1045, 64, %s9, [#allocation4]
    $region61: #{tpu_custom_call.1} parent=1 // pred_fallthru
      _
    // Predicated region
    $region62: #{tpu_custom_call.1} parent=1 // pred_check
      _
    $region63: #{tpu_custom_call.1} parent=1 // pred_check_branch
      %1049 = sbr.rel (0) target = $region65
    $region64: #{tpu_custom_call.1} parent=1 // pred_region
      %1050 = dma.done [#allocation4], 64
    $region65: #{tpu_custom_call.1} parent=1 // pred_fallthru
      _
    %1051 = vsyncpa [#allocation3], 1
    %1052 = vsyncpa [#allocation6], 1
    %1053 = vsyncpa [#allocation9], 1
    %1054 = vsyncpa [#allocation4], 1

</llo_original>
